<compile_context>
chip_gen: v6e
topology: v6e:2x2x1
jax: 0.10.0
libtpu: 0.0.40
codegen_flags: <defaults>
</compile_context>

<pallas_src>
import functools

import jax
import jax.numpy as jnp
from jax.experimental import pallas as pl
from jax.experimental.pallas import tpu as pltpu

LANE = 128


def mlp_kernel(x_ref, p_ref, b2_ref, o_ref):
    """One lane-dense (1, TILE_N) tile of the batch.

    x_ref : (1, TILE_N) VMEM  -- inputs, batch on the lane axis
    p_ref : (Hp, 3)     VMEM  -- col 0 = 0.5*W1, col 1 = 0.5*b1, col 2 = 0.5*W2
    b2_ref: (1, 1)      SMEM  -- folded output bias scalar (b2 + 0.5*sum(W2))
    o_ref : (1, TILE_N) VMEM  -- lane-dense output row
    """
    x = x_ref[...]                     # (1, TN)
    p = p_ref[...]                     # (Hp, 3)
    w1 = p[:, 0:1]                     # (Hp, 1)  = 0.5*W1
    b1 = p[:, 1:2]                     # (Hp, 1)  = 0.5*b1
    w2 = p[:, 2:3]                     # (Hp, 1)  = 0.5*W2

    # hidden layer (tanh form of sigmoid): pure VPU outer product + EUP tanh
    h = jnp.tanh(w1 * x + b1)                                   # (Hp, TN)
    # output layer: VPU multiply + XLU sublane reduction, + SMEM scalar bias
    o = jnp.sum(h * w2, axis=0, keepdims=True) + b2_ref[0, 0]   # (1, TN)
    o_ref[...] = o.astype(o_ref.dtype)


def pack_params(w1, b1, w2, b2):
    """One-time preprocessing: fold sigmoid->tanh constants and pack to (Hp, 3).

    sigmoid(z) = 0.5 + 0.5*tanh(z/2), so
      y = sum_h W2_h*sigmoid(W1_h*x + b1_h) + b2
        = sum_h (0.5*W2_h)*tanh(0.5*W1_h*x + 0.5*b1_h) + (b2 + 0.5*sum(W2))
    Hp is H rounded up to a multiple of 8 (zero rows contribute nothing).
    """
    H = w1.shape[-1]
    Hp = max(8, pl.cdiv(H, 8) * 8)
    w1f = jnp.zeros((Hp,), jnp.float32).at[:H].set(0.5 * w1.reshape(H).astype(jnp.float32))
    b1f = jnp.zeros((Hp,), jnp.float32).at[:H].set(0.5 * b1.reshape(H).astype(jnp.float32))
    w2f = jnp.zeros((Hp,), jnp.float32).at[:H].set(0.5 * w2.reshape(H).astype(jnp.float32))
    params = jnp.stack([w1f, b1f, w2f], axis=1)                       # (Hp, 3)
    b2f = (jnp.asarray(b2, jnp.float32).reshape(())
           + 0.5 * jnp.sum(w2.astype(jnp.float32))).reshape(1, 1)     # SMEM scalar
    return params, b2f


@functools.partial(jax.jit, static_argnames=("tile_n",))
def red_neuronal_forward_packed(x, params, b2s, *, tile_n=8192):
    """x: (N, 1) f32, params: (Hp, 3), b2s: (1, 1) -> (N, 1) f32."""
    N, E = x.shape
    assert E == 1, "kernel specialised for entradas == 1 (the csv 'dia' column)"
    # TODO(synk): entradas > 1 would need a real tiled MXU matmul for layer 1.
    Hp = params.shape[0]

    # Lane tile: multiple of LANE; aim for >= 2 grid steps (v7x dual-TC) when
    # the batch allows it, capped at tile_n (VMEM-safe on v5e/v6e/v7x).
    n_pad_min = pl.cdiv(N, LANE) * LANE
    half = pl.cdiv(pl.cdiv(n_pad_min, 2), LANE) * LANE
    tile = int(min(tile_n, max(LANE, half)))
    grid = (pl.cdiv(N, tile),)

    x_row = x.reshape(1, N).astype(jnp.float32)   # no padding copy; ragged last
                                                  # tile handled by Pallas masking
    out_row = pl.pallas_call(
        mlp_kernel,
        out_shape=jax.ShapeDtypeStruct((1, N), jnp.float32),
        grid=grid,
        in_specs=[
            pl.BlockSpec((1, tile), lambda i: (0, i)),              # x tile
            pl.BlockSpec((Hp, 3), lambda i: (0, 0)),                # params, resident
            pl.BlockSpec(memory_space=pltpu.MemorySpace.SMEM),      # b2 scalar
        ],
        out_specs=pl.BlockSpec((1, tile), lambda i: (0, i)),        # lane-dense out
        compiler_params=pltpu.CompilerParams(
            dimension_semantics=("parallel",),
        ),
    )(x_row, params, b2s)

    return out_row.reshape(N, 1)


def red_neuronal_forward(x, w1, b1, w2, b2, *, tile_n=8192):
    """Convenience wrapper: pack params then run the jitted kernel."""
    params, b2s = pack_params(w1, b1, w2, b2)
    return red_neuronal_forward_packed(x, params, b2s, tile_n=tile_n)


def init_params(key, entradas, ocultas):
    """Deterministic init mimicking nn.Linear's U(-1/sqrt(fan_in), 1/sqrt(fan_in))."""
    k1, k2, k3, k4 = jax.random.split(key, 4)
    bound1 = 1.0 / jnp.sqrt(jnp.float32(entradas))
    bound2 = 1.0 / jnp.sqrt(jnp.float32(ocultas))
    # stored transposed relative to PyTorch (out, in) -> here (in, out)
    w1 = jax.random.uniform(k1, (entradas, ocultas), jnp.float32, -bound1, bound1)
    b1 = jax.random.uniform(k2, (1, ocultas), jnp.float32, -bound1, bound1)
    w2 = jax.random.uniform(k3, (ocultas, 1), jnp.float32, -bound2, bound2)
    b2 = jax.random.uniform(k4, (1, 1), jnp.float32, -bound2, bound2)
    return w1, b1, w2, b2


if __name__ == "__main__":
    key = jax.random.PRNGKey(0)
    kx, kp = jax.random.split(key)

    entradas, ocultas = 1, 32
    w1, b1, w2, b2 = init_params(kp, entradas, ocultas)
    params, b2s = pack_params(w1, b1, w2, b2)   # one-time preprocessing

    def ref_fn(x):
        # pure-JAX reference with the exact sigmoid
        return jnp.dot(jax.nn.sigmoid(jnp.dot(x, w1) + b1), w2) + b2

    # Case 1: the original script's shape -- datos['dia'].reshape(-1, 1), N=8.
    N1 = 8
    x1 = jnp.arange(1, N1 + 1, dtype=jnp.float32).reshape(N1, entradas)
    y1 = red_neuronal_forward_packed(x1, params, b2s)
    jax.block_until_ready(y1)
    assert y1.shape == (N1, 1)
    assert jnp.allclose(y1, ref_fn(x1), atol=1e-4, rtol=1e-4), (y1, ref_fn(x1))

    # Case 2: a multi-tile, ragged-last-tile batch (exercises >=2 grid steps).
    N2 = 300
    x2 = jax.random.uniform(kx, (N2, entradas), jnp.float32, 0.0, 31.0)
    y2 = red_neuronal_forward_packed(x2, params, b2s)
    jax.block_until_ready(y2)
    assert y2.shape == (N2, 1)
    assert jnp.allclose(y2, ref_fn(x2), atol=1e-4, rtol=1e-4)

    print("KERNEL_OK")
</pallas_src>

<mosaic_0001>
module attributes {stable_mosaic.version = 11 : i64} {
  func.func @mlp_kernel(%arg0: i32, %arg1: memref<1x128xf32, #tpu.memory_space<vmem>>, %arg2: memref<32x3xf32, #tpu.memory_space<vmem>>, %arg3: memref<1x1xf32, #tpu.memory_space<smem>>, %arg4: memref<1x128xf32, #tpu.memory_space<vmem>>) attributes {dimension_semantics = [#tpu.dimension_semantics<parallel>], iteration_bounds = array<i64: 1>, scalar_prefetch = 0 : i64, scratch_operands = 0 : i64, tpu.core_type = #tpu.core_type<tc>, window_params = [{transform_indices = @transform_0, window_bounds = array<i64: 1, 128>}, {pipeline_mode = #tpu.pipeline_mode<synchronous>, transform_indices = @transform_1, window_bounds = array<i64: 32, 3>}, {transform_indices = @transform_2, window_bounds = array<i64: 1, 1>}, {transform_indices = @transform_3, window_bounds = array<i64: 1, 128>}]} {
    %c0 = arith.constant 0 : index
    %c0_0 = arith.constant 0 : index
    %0 = vector.load %arg1[%c0, %c0_0] : memref<1x128xf32, #tpu.memory_space<vmem>>, vector<1x128xf32>
    %c0_1 = arith.constant 0 : index
    %c0_2 = arith.constant 0 : index
    %1 = vector.load %arg2[%c0_1, %c0_2] : memref<32x3xf32, #tpu.memory_space<vmem>>, vector<32x3xf32>
    %2 = vector.extract_strided_slice %1 {offsets = [0, 0], sizes = [32, 1], strides = [1, 1]} : vector<32x3xf32> to vector<32x1xf32>
    %3 = vector.extract_strided_slice %1 {offsets = [0, 1], sizes = [32, 1], strides = [1, 1]} : vector<32x3xf32> to vector<32x1xf32>
    %4 = vector.extract_strided_slice %1 {offsets = [0, 2], sizes = [32, 1], strides = [1, 1]} : vector<32x3xf32> to vector<32x1xf32>
    %5 = vector.broadcast %2 : vector<32x1xf32> to vector<32x128xf32>
    %6 = vector.broadcast %0 : vector<1x128xf32> to vector<32x128xf32>
    %7 = arith.mulf %5, %6 : vector<32x128xf32>
    %8 = vector.broadcast %3 : vector<32x1xf32> to vector<32x128xf32>
    %9 = arith.addf %7, %8 : vector<32x128xf32>
    %10 = math.tanh %9 : vector<32x128xf32>
    %11 = vector.broadcast %4 : vector<32x1xf32> to vector<32x128xf32>
    %12 = arith.mulf %10, %11 : vector<32x128xf32>
    %cst = arith.constant dense<0.000000e+00> : vector<128xf32>
    %13 = vector.multi_reduction <add>, %12, %cst [0] : vector<32x128xf32> to vector<128xf32>
    %14 = vector.shape_cast %13 : vector<128xf32> to vector<1x128xf32>
    %c0_3 = arith.constant 0 : index
    %c0_4 = arith.constant 0 : index
    %15 = memref.load %arg3[%c0_3, %c0_4] : memref<1x1xf32, #tpu.memory_space<smem>>
    %16 = vector.broadcast %15 : f32 to vector<1x128xf32>
    %17 = arith.addf %14, %16 : vector<1x128xf32>
    %c0_5 = arith.constant 0 : index
    %c0_6 = arith.constant 0 : index
    %18 = vector.load %arg4[%c0_5, %c0_6] : memref<1x128xf32, #tpu.memory_space<vmem>>, vector<1x128xf32>
    tpu.vector_store %arg4[%c0_5, %c0_6], %17 {strides = array<i32>} : memref<1x128xf32, #tpu.memory_space<vmem>>, vector<1x128xf32>,
    return
  }
  func.func @transform_0(%arg0: i32) -> (i32, i32) {
    %c0_i32 = arith.constant 0 : i32
    %c0_i32_0 = arith.constant 0 : i32
    return %c0_i32, %arg0 : i32, i32
  }
  func.func @transform_1(%arg0: i32) -> (i32, i32) {
    %c0_i32 = arith.constant 0 : i32
    %c0_i32_0 = arith.constant 0 : i32
    %c0_i32_1 = arith.constant 0 : i32
    return %c0_i32, %c0_i32_0 : i32, i32
  }
  func.func @transform_2(%arg0: i32) -> (i32, i32) {
    %c0_i32 = arith.constant 0 : i32
    %c0_i32_0 = arith.constant 0 : i32
    %c0_i32_1 = arith.constant 0 : i32
    return %c0_i32, %c0_i32_0 : i32, i32
  }
  func.func @transform_3(%arg0: i32) -> (i32, i32) {
    %c0_i32 = arith.constant 0 : i32
    %c0_i32_0 = arith.constant 0 : i32
    return %c0_i32, %arg0 : i32, i32
  }
}

</mosaic_0001>

<llo_original>
// kernel: red_neuronal_forward_packed.1
$region0: #{red_neuronal_forward_packed.1}
  #allocation0 [shape = 'u32[]', space=smem, size = 0x4, offset = 0x4, fixed_abs, tag = 'smem constant byte address 0x4 - core index']
  #allocation1 [shape = 'u32[144,128]{1,0:T(1,128)}', space=vmem, size = 0x12000, scoped, tag = 'internal scratch']
  #allocation2 [shape = 'f32[1,1]{1,0:T(1,128)S(6)}', space=smem, size = 0x200, scoped, tag = 'scoped memory for red_neuronal_forward_packed.1']
  %s0 = inlined_call_operand.vmem [shape: f32[1,8], index: 0, kind: input, shape index: {}]
  %s1 = inlined_call_operand.vmem [shape: f32[32,3], index: 1, kind: input, shape index: {}]
  %s2 = inlined_call_operand.<no memory space> [shape: f32[1,1], index: 2, kind: input, shape index: {}]
  %s3 = inlined_call_operand.hbm [shape: f32[1,8], index: 3, kind: output, shape index: {}]
  %s4 = sld [smem:[#allocation0]]
  $region22: #{red_neuronal_forward_packed.1} parent=0
    _
  %s6 = ssub.s32 1, %s4
  %s7 = scalar_select 0, %s6, %s4
  %8 = sst [smem:[#allocation2]] %s2
  $region1: #{red_neuronal_forward_packed.1} parent=0
    #allocation3 [shape = 'u8[512]{0}', space=vmem, size = 0x400, scoped, tag = 'output window, operand 0, single buffered']
    #allocation4 [shape = 's32[1]{0}', space=sflag, size = 0x4, scoped, tag = 'scoped memory for red_neuronal_forward_packed.1']
    %9 = vsyncpa [#allocation4], 0
    // Predicated region
    $region2: #{red_neuronal_forward_packed.1} parent=1 // pred_check
      _
    $region3: #{red_neuronal_forward_packed.1} parent=1 // pred_check_branch
      %11 = sbr.rel (0) target = $region5
    $region4: #{red_neuronal_forward_packed.1} parent=1 // pred_region
      _
    $region5: #{red_neuronal_forward_packed.1} parent=1 // pred_fallthru
      _
    // Predicated region
    $region6: #{red_neuronal_forward_packed.1} parent=1 // pred_check
      _
    $region7: #{red_neuronal_forward_packed.1} parent=1 // pred_check_branch
      %13 = sbr.rel (0) target = $region9
    $region8: #{red_neuronal_forward_packed.1} parent=1 // pred_region
      _
    $region9: #{red_neuronal_forward_packed.1} parent=1 // pred_fallthru
      _
    // Predicated region
    $region10: #{red_neuronal_forward_packed.1} parent=1 // pred_check
      _
    $region11: #{red_neuronal_forward_packed.1} parent=1 // pred_check_branch
      %15 = sbr.rel (0) target = $region13
    $region12: #{red_neuronal_forward_packed.1} parent=1 // pred_region
      _
    $region13: #{red_neuronal_forward_packed.1} parent=1 // pred_fallthru
      _
    %v16 = vld [vmem:[%s0] sm:$0x1]
    %v17 = vld [vmem:[%s1] sm:$0xff]
    %v18 = vld [vmem:[%s1 + $0x8] sm:$0xff]
    %v19 = vld [vmem:[%s1 + $0x10] sm:$0xff]
    %v20 = vld [vmem:[%s1 + $0x18] sm:$0xff]
    %22 = vset.pattern.permute.xlu0 0
    %23 = vperm.xlu0 %22, %v17
    %v24 = vpop.permute.xlu0 %23
    %27 = vset.pattern.permute.xlu0 0
    %28 = vperm.xlu0 %27, %v18
    %v29 = vpop.permute.xlu0 %28
    %32 = vset.pattern.permute.xlu0 0
    %33 = vperm.xlu0 %32, %v19
    %v34 = vpop.permute.xlu0 %33
    %37 = vset.pattern.permute.xlu0 0
    %38 = vperm.xlu0 %37, %v20
    %v39 = vpop.permute.xlu0 %38
    %v42 = vlaneseq
    %v43 = vshrl.u32 %v42, 7
    %v44 = vsub.s32 0, %v43
    %v45 = vrot.slane %v16, %v44
    %v47 = vmul.f32 %v24, %v45
    %v48 = vmul.f32 %v29, %v45
    %v49 = vmul.f32 %v34, %v45
    %v50 = vmul.f32 %v39, %v45
    %51 = vset.pattern.permute.xlu0 1
    %52 = vperm.xlu0 %51, %v17
    %v53 = vpop.permute.xlu0 %52
    %55 = vset.pattern.permute.xlu0 1
    %56 = vperm.xlu0 %55, %v18
    %v57 = vpop.permute.xlu0 %56
    %59 = vset.pattern.permute.xlu0 1
    %60 = vperm.xlu0 %59, %v19
    %v61 = vpop.permute.xlu0 %60
    %63 = vset.pattern.permute.xlu0 1
    %64 = vperm.xlu0 %63, %v20
    %v65 = vpop.permute.xlu0 %64
    %v67 = vadd.f32 %v47, %v53
    %v68 = vadd.f32 %v48, %v57
    %v69 = vadd.f32 %v49, %v61
    %v70 = vadd.f32 %v50, %v65
    %v71 = vtanh.pop %v67
    %v72 = vtanh.pop %v68
    %v73 = vtanh.pop %v69
    %v74 = vtanh.pop %v70
    %75 = vset.pattern.permute.xlu0 2
    %76 = vperm.xlu0 %75, %v17
    %v77 = vpop.permute.xlu0 %76
    %79 = vset.pattern.permute.xlu0 2
    %80 = vperm.xlu0 %79, %v18
    %v81 = vpop.permute.xlu0 %80
    %83 = vset.pattern.permute.xlu0 2
    %84 = vperm.xlu0 %83, %v19
    %v85 = vpop.permute.xlu0 %84
    %87 = vset.pattern.permute.xlu0 2
    %88 = vperm.xlu0 %87, %v20
    %v89 = vpop.permute.xlu0 %88
    %v91 = vmul.f32 %v71, %v77
    %v92 = vmul.f32 %v72, %v81
    %v93 = vmul.f32 %v73, %v85
    %v94 = vmul.f32 %v74, %v89
    %v95 = vadd.f32 %v91, %v92
    %v96 = vadd.f32 %v95, %v93
    %v97 = vadd.f32 %v96, %v94
    %v98 = vrot.slane %v97, 4
    %v99 = vadd.f32 %v97, %v98
    %v100 = vrot.slane %v99, 2
    %v101 = vadd.f32 %v99, %v100
    %v102 = vrot.slane %v101, 1
    %v103 = vadd.f32 %v101, %v102
    %s104 = sld [smem:[#allocation2]]
    %v105 = vstv %s104
    %v106 = vadd.f32 %v103, %v105
    %107 = vst [vmem:[#allocation3] sm:$0x1] %v106
    // Predicated region
    $region14: #{red_neuronal_forward_packed.1} parent=1 // pred_check
      _
    $region15: #{red_neuronal_forward_packed.1} parent=1 // pred_check_branch
      %109 = sbr.rel (0) target = $region17
    $region16: #{red_neuronal_forward_packed.1} parent=1 // pred_region
      %s111 = ssub.s32 16, 16
      %112 = vsyncadd [#allocation4], %s111
      %s114 = sshll.u32 [#allocation3], 4
      %s115 = int_to_ptr.vmem [resolvable:$true] %s114
      %117 = dma.vmem_to_hbm [thread:$0]  %s115, 16, %s3, [#allocation4]
    $region17: #{red_neuronal_forward_packed.1} parent=1 // pred_fallthru
      _
    // Predicated region
    $region18: #{red_neuronal_forward_packed.1} parent=1 // pred_check
      _
    $region19: #{red_neuronal_forward_packed.1} parent=1 // pred_check_branch
      %119 = sbr.rel (0) target = $region21
    $region20: #{red_neuronal_forward_packed.1} parent=1 // pred_region
      %120 = dma.done [#allocation4], 16
    $region21: #{red_neuronal_forward_packed.1} parent=1 // pred_fallthru
      _
    %121 = vsyncpa [#allocation4], 1

</llo_original>
